<compile_context>
chip_gen: v5e
topology: v5e:2x2
jax: 0.10.0
libtpu: 0.0.40
codegen_flags: <defaults>
</compile_context>

<pallas_src>
import functools
import math

import jax
import jax.numpy as jnp
from jax import lax
from jax.experimental import pallas as pl
from jax.experimental.pallas import tpu as pltpu


def _focal_loss_kernel(logits_ref, targets_ref, out_ref, *, alpha, gamma,
                       mode, s_total):
    """One (batch, spatial-tile) grid step.

    logits_ref : (C, TS)  native dtype, spatial on the 128-lane axis
    targets_ref: (1, TS)  int32 class indices
    out_ref    : (1, TS)  f32 per-element focal   (mode == 'per_elem')
                 (1, 1)   f32 per-tile sum        (mode == 'partial_sum')
    """
    c, ts = logits_ref.shape
    x = logits_ref[...].astype(jnp.float32)              # (C, TS)
    t = targets_ref[...]                                  # (1, TS)

    small_c = c <= 16

    # ---- stable log-softmax pieces; class axis = sublane axis -------------
    if small_c:
        m = x[0:1, :]
        for ci in range(1, c):
            m = jnp.maximum(m, x[ci:ci + 1, :])            # VALU-only chain
    else:
        m = jnp.max(x, axis=0, keepdims=True)
    z = x - m                                              # (C, TS)
    ez = jnp.exp(z)                                        # (C, TS)  EUP
    if small_c:
        se = ez[0:1, :]
        for ci in range(1, c):
            se = se + ez[ci:ci + 1, :]
    else:
        se = jnp.sum(ez, axis=0, keepdims=True)
    lse = jnp.log(se)                                      # (1, TS)  EUP

    # ---- target logit via per-class select (no one-hot multiply+reduce) ---
    # TODO(synk): out-of-range targets (e.g. torch ignore_index=-100) fall
    # through to z_t = 0 (=> focal = alpha*lse); explicit ignore_index
    # semantics would need an extra mask here.
    if small_c:
        z_t = jnp.zeros((1, ts), jnp.float32)
        for ci in range(c):
            z_t = jnp.where(t == ci, z[ci:ci + 1, :], z_t)
    else:
        cls = lax.broadcasted_iota(jnp.int32, (c, ts), 0)
        z_t = jnp.sum(jnp.where(cls == t, z, 0.0), axis=0, keepdims=True)

    ce = jnp.maximum(lse - z_t, 0.0)                       # (1, TS)
    pt = jnp.exp(-ce)                                      # ce >= 0 => pt <= 1

    one_minus_pt = 1.0 - pt
    g = float(gamma)
    if g.is_integer() and g >= 0:
        w = jnp.ones_like(one_minus_pt)
        for _ in range(int(g)):                            # gamma=2 -> 2 muls
            w = w * one_minus_pt
    else:
        w = jnp.power(jnp.maximum(one_minus_pt, 0.0), g)

    focal = alpha * w * ce                                 # (1, TS)

    if mode == "partial_sum":
        if s_total % ts != 0:
            # Mandatory mask: OOB lanes of the ragged last spatial tile must
            # not contribute to the per-tile sum.
            lane = (lax.broadcasted_iota(jnp.int32, (1, ts), 1)
                    + pl.program_id(1) * ts)
            focal = jnp.where(lane < s_total, focal, 0.0)
        out_ref[...] = jnp.sum(focal, axis=1, keepdims=True)
    else:
        # Lane-dense per-element output.  OOB lanes of a ragged last tile are
        # clipped on writeback, so no mask is needed here.
        out_ref[...] = focal


def _pick_tile_s(b, c, s, itemsize, tile_s=None):
    """Spatial (lane-axis) tile size: multiple of 128 or full extent."""
    if tile_s is not None:
        ts = int(tile_s)
        return s if ts >= s else max(128, (ts // 128) * 128)
    # ~2 MiB of logits per block: large enough that the ~0.35 us/grid-step
    # pipeline overhead is negligible next to the DMA, small enough that
    # 2 inputs x 2 pipeline buffers stay far below the v7x 32 MiB scoped
    # VMEM default (v5e/v6e have even more headroom).
    budget = 2 * 1024 * 1024
    ts = max(128, (budget // max(c * itemsize, 1) // 128) * 128)
    if ts < s:
        return ts
    if b == 1 and s >= 256:
        # Guarantee >= 2 grid steps so the 'parallel' axis can split across
        # both v7x TensorCores (v5e/v6e: single TC, unaffected).
        half = -(-s // 2)
        ts = ((half + 127) // 128) * 128
        return s if ts >= s else ts
    return s


def focal_loss(inputs, targets, *, alpha=1.0, gamma=2.0, reduction="mean",
               tile_s=None):
    """Pallas TPU implementation of FocalLoss.forward.

    inputs:  (N, C) or (B, C, d1, ..., dk) raw logits (any float dtype).
    targets: (N,)   or (B, d1, ..., dk) integer class indices.
    """
    if inputs.ndim > 2:
        # torch CrossEntropyLoss layout (B, C, d1..dk): keep the native
        # channel-second layout; flattening spatial dims is a free reshape
        # (no HBM transpose before the bandwidth-bound kernel).
        b, c = inputs.shape[0], inputs.shape[1]
        s = math.prod(inputs.shape[2:])
        logits = inputs.reshape(b, c, s)
    else:
        # (N, C): one "image" with rows on the lane axis.  The transpose is a
        # small wrapper-side XLA op; the segmentation-shaped >2D path above
        # (the hot path for this module) needs no transpose at all.
        n, c = inputs.shape
        b, s = 1, n
        logits = inputs.T.reshape(1, c, n)
    tgt = targets.reshape(b, 1, s).astype(jnp.int32)
    n_total = b * s

    ts = _pick_tile_s(b, c, s, jnp.dtype(logits.dtype).itemsize, tile_s)
    ns = pl.cdiv(s, ts)
    grid = (b, ns)

    # TODO(synk): for vocab-scale C (C*TS*4 bytes > per-buffer VMEM budget)
    # add an "arbitrary" class-axis grid dim with an online logsumexp; not
    # needed for segmentation-sized C.
    in_specs = [
        pl.BlockSpec((None, c, ts), lambda bi, si: (bi, 0, si)),
        pl.BlockSpec((None, 1, ts), lambda bi, si: (bi, 0, si)),
    ]
    compiler_params = pltpu.CompilerParams(
        dimension_semantics=("parallel", "parallel"),
        vmem_limit_bytes=32 * 1024 * 1024,
    )

    if reduction in ("mean", "sum"):
        kernel = functools.partial(
            _focal_loss_kernel, alpha=float(alpha), gamma=float(gamma),
            mode="partial_sum", s_total=s)
        partials = pl.pallas_call(
            kernel,
            out_shape=jax.ShapeDtypeStruct((b, ns, 1, 1), jnp.float32),
            grid_spec=pltpu.PrefetchScalarGridSpec(
                num_scalar_prefetch=0,
                grid=grid,
                in_specs=in_specs,
                out_specs=pl.BlockSpec((None, None, 1, 1),
                                       lambda bi, si: (bi, si, 0, 0)),
            ),
            compiler_params=compiler_params,
        )(logits, tgt)
        total = jnp.sum(partials)        # tiny: one f32 per grid step
        return total / n_total if reduction == "mean" else total

    # reduction == 'none': lane-dense per-element output.
    kernel = functools.partial(
        _focal_loss_kernel, alpha=float(alpha), gamma=float(gamma),
        mode="per_elem", s_total=s)
    per_elem = pl.pallas_call(
        kernel,
        out_shape=jax.ShapeDtypeStruct((b, 1, s), jnp.float32),
        grid_spec=pltpu.PrefetchScalarGridSpec(
            num_scalar_prefetch=0,
            grid=grid,
            in_specs=in_specs,
            out_specs=pl.BlockSpec((None, 1, ts), lambda bi, si: (bi, 0, si)),
        ),
        compiler_params=compiler_params,
    )(logits, tgt)
    return per_elem.reshape(targets.shape)


def _reference_focal_loss(inputs, targets, alpha=1.0, gamma=2.0,
                          reduction="mean"):
    if inputs.ndim > 2:
        perm = (0,) + tuple(range(2, inputs.ndim)) + (1,)
        logits2d = jnp.transpose(inputs, perm).reshape(-1, inputs.shape[1])
    else:
        logits2d = inputs.reshape(-1, inputs.shape[-1])
    t = targets.reshape(-1).astype(jnp.int32)
    logp = jax.nn.log_softmax(logits2d.astype(jnp.float32), axis=-1)
    ce = -jnp.take_along_axis(logp, t[:, None], axis=-1)[:, 0]
    pt = jnp.exp(-ce)
    focal = alpha * (1.0 - pt) ** gamma * ce
    if reduction == "mean":
        return jnp.mean(focal)
    if reduction == "sum":
        return jnp.sum(focal)
    return focal.reshape(targets.shape)


if __name__ == "__main__":
    key = jax.random.PRNGKey(0)
    k1, k2, k3, k4 = jax.random.split(key, 4)

    # Segmentation-style logits: batch=2, channels=4, spatial=16x16 -> S=256.
    B, C, H, W = 2, 4, 16, 16
    inputs = jax.random.normal(k1, (B, C, H, W), dtype=jnp.float32)
    targets = jax.random.randint(k2, (B, H, W), 0, C, dtype=jnp.int32)

    # mean: default tiling -> full-extent spatial tile, grid=(2, 1).
    loss = jax.block_until_ready(focal_loss(inputs, targets, reduction="mean"))
    ref = _reference_focal_loss(inputs, targets, reduction="mean")
    assert jnp.allclose(loss, ref, atol=2e-5, rtol=1e-5), (loss, ref)

    # sum with forced 128-lane spatial tiles -> grid=(2, 2), multi-tile partials.
    loss_sum = jax.block_until_ready(
        focal_loss(inputs, targets, reduction="sum", tile_s=128))
    ref_sum = _reference_focal_loss(inputs, targets, reduction="sum")
    assert jnp.allclose(loss_sum, ref_sum, atol=1e-3, rtol=1e-5), (loss_sum,
                                                                   ref_sum)

    # 'none': lane-dense per-element output, same shape as targets.
    loss_none = jax.block_until_ready(
        focal_loss(inputs, targets, reduction="none"))
    ref_none = _reference_focal_loss(inputs, targets, reduction="none")
    assert loss_none.shape == targets.shape
    assert jnp.allclose(loss_none, ref_none, atol=2e-5, rtol=1e-5)

    # 2D (N, C) input with a ragged last spatial tile (N=300 -> tiles 256+44)
    # exercising the mandatory mask in the partial-sum path.
    N2, C2 = 300, 5
    x2 = jax.random.normal(k3, (N2, C2), dtype=jnp.float32)
    t2 = jax.random.randint(k4, (N2,), 0, C2, dtype=jnp.int32)
    loss2 = jax.block_until_ready(focal_loss(x2, t2, reduction="mean"))
    ref2 = _reference_focal_loss(x2, t2, reduction="mean")
    assert jnp.allclose(loss2, ref2, atol=2e-5, rtol=1e-5), (loss2, ref2)

    print("KERNEL_OK")
</pallas_src>

<mosaic_0001>
module attributes {stable_mosaic.version = 11 : i64} {
  func.func @_focal_loss_kernel(%arg0: i32, %arg1: i32, %arg2: memref<1x4x256xf32, #tpu.memory_space<vmem>>, %arg3: memref<1x1x256xi32, #tpu.memory_space<vmem>>, %arg4: memref<1x1x1x1xf32, #tpu.memory_space<vmem>>) attributes {dimension_semantics = [#tpu.dimension_semantics<parallel>, #tpu.dimension_semantics<parallel>], iteration_bounds = array<i64: 2, 1>, scalar_prefetch = 0 : i64, scratch_operands = 0 : i64, tpu.core_type = #tpu.core_type<tc>, window_params = [{transform_indices = @transform_0, window_bounds = array<i64: 1, 4, 256>}, {transform_indices = @transform_1, window_bounds = array<i64: 1, 1, 256>}, {transform_indices = @transform_2, window_bounds = array<i64: 1, 1, 1, 1>}]} {
    %c0 = arith.constant 0 : index
    %c0_0 = arith.constant 0 : index
    %c0_1 = arith.constant 0 : index
    %0 = vector.load %arg2[%c0, %c0_0, %c0_1] : memref<1x4x256xf32, #tpu.memory_space<vmem>>, vector<1x4x256xf32>
    %1 = vector.shape_cast %0 : vector<1x4x256xf32> to vector<4x256xf32>
    %c0_2 = arith.constant 0 : index
    %c0_3 = arith.constant 0 : index
    %c0_4 = arith.constant 0 : index
    %2 = vector.load %arg3[%c0_2, %c0_3, %c0_4] : memref<1x1x256xi32, #tpu.memory_space<vmem>>, vector<1x1x256xi32>
    %3 = vector.shape_cast %2 : vector<1x1x256xi32> to vector<1x256xi32>
    %4 = vector.extract_strided_slice %1 {offsets = [0, 0], sizes = [1, 256], strides = [1, 1]} : vector<4x256xf32> to vector<1x256xf32>
    %5 = vector.extract_strided_slice %1 {offsets = [1, 0], sizes = [1, 256], strides = [1, 1]} : vector<4x256xf32> to vector<1x256xf32>
    %6 = arith.maximumf %4, %5 : vector<1x256xf32>
    %7 = vector.extract_strided_slice %1 {offsets = [2, 0], sizes = [1, 256], strides = [1, 1]} : vector<4x256xf32> to vector<1x256xf32>
    %8 = arith.maximumf %6, %7 : vector<1x256xf32>
    %9 = vector.extract_strided_slice %1 {offsets = [3, 0], sizes = [1, 256], strides = [1, 1]} : vector<4x256xf32> to vector<1x256xf32>
    %10 = arith.maximumf %8, %9 : vector<1x256xf32>
    %11 = vector.broadcast %10 : vector<1x256xf32> to vector<4x256xf32>
    %12 = arith.subf %1, %11 : vector<4x256xf32>
    %13 = math.exp %12 : vector<4x256xf32>
    %14 = vector.extract_strided_slice %13 {offsets = [0, 0], sizes = [1, 256], strides = [1, 1]} : vector<4x256xf32> to vector<1x256xf32>
    %15 = vector.extract_strided_slice %13 {offsets = [1, 0], sizes = [1, 256], strides = [1, 1]} : vector<4x256xf32> to vector<1x256xf32>
    %16 = arith.addf %14, %15 : vector<1x256xf32>
    %17 = vector.extract_strided_slice %13 {offsets = [2, 0], sizes = [1, 256], strides = [1, 1]} : vector<4x256xf32> to vector<1x256xf32>
    %18 = arith.addf %16, %17 : vector<1x256xf32>
    %19 = vector.extract_strided_slice %13 {offsets = [3, 0], sizes = [1, 256], strides = [1, 1]} : vector<4x256xf32> to vector<1x256xf32>
    %20 = arith.addf %18, %19 : vector<1x256xf32>
    %21 = math.log %20 : vector<1x256xf32>
    %cst = arith.constant 0.000000e+00 : f32
    %22 = vector.broadcast %cst : f32 to vector<1x256xf32>
    %c0_i32 = arith.constant 0 : i32
    %23 = vector.broadcast %c0_i32 : i32 to vector<1x256xi32>
    %24 = arith.cmpi eq, %3, %23 : vector<1x256xi32>
    %25 = vector.extract_strided_slice %12 {offsets = [0, 0], sizes = [1, 256], strides = [1, 1]} : vector<4x256xf32> to vector<1x256xf32>
    %26 = arith.select %24, %25, %22 : vector<1x256xi1>, vector<1x256xf32>
    %c1_i32 = arith.constant 1 : i32
    %27 = vector.broadcast %c1_i32 : i32 to vector<1x256xi32>
    %28 = arith.cmpi eq, %3, %27 : vector<1x256xi32>
    %29 = vector.extract_strided_slice %12 {offsets = [1, 0], sizes = [1, 256], strides = [1, 1]} : vector<4x256xf32> to vector<1x256xf32>
    %30 = arith.select %28, %29, %26 : vector<1x256xi1>, vector<1x256xf32>
    %c2_i32 = arith.constant 2 : i32
    %31 = vector.broadcast %c2_i32 : i32 to vector<1x256xi32>
    %32 = arith.cmpi eq, %3, %31 : vector<1x256xi32>
    %33 = vector.extract_strided_slice %12 {offsets = [2, 0], sizes = [1, 256], strides = [1, 1]} : vector<4x256xf32> to vector<1x256xf32>
    %34 = arith.select %32, %33, %30 : vector<1x256xi1>, vector<1x256xf32>
    %c3_i32 = arith.constant 3 : i32
    %35 = vector.broadcast %c3_i32 : i32 to vector<1x256xi32>
    %36 = arith.cmpi eq, %3, %35 : vector<1x256xi32>
    %37 = vector.extract_strided_slice %12 {offsets = [3, 0], sizes = [1, 256], strides = [1, 1]} : vector<4x256xf32> to vector<1x256xf32>
    %38 = arith.select %36, %37, %34 : vector<1x256xi1>, vector<1x256xf32>
    %39 = arith.subf %21, %38 : vector<1x256xf32>
    %cst_5 = arith.constant 0.000000e+00 : f32
    %40 = vector.broadcast %cst_5 : f32 to vector<1x256xf32>
    %41 = arith.maximumf %39, %40 : vector<1x256xf32>
    %cst_6 = arith.constant 0.000000e+00 : f32
    %42 = vector.broadcast %cst_6 : f32 to vector<1x256xf32>
    %43 = arith.subf %42, %41 : vector<1x256xf32>
    %44 = math.exp %43 : vector<1x256xf32>
    %cst_7 = arith.constant 1.000000e+00 : f32
    %45 = vector.broadcast %cst_7 : f32 to vector<1x256xf32>
    %46 = arith.subf %45, %44 : vector<1x256xf32>
    %cst_8 = arith.constant 1.000000e+00 : f32
    %47 = vector.broadcast %cst_8 : f32 to vector<1x256xf32>
    %48 = arith.mulf %47, %46 : vector<1x256xf32>
    %49 = arith.mulf %48, %46 : vector<1x256xf32>
    %cst_9 = arith.constant 1.000000e+00 : f32
    %50 = vector.broadcast %cst_9 : f32 to vector<1x256xf32>
    %51 = arith.mulf %50, %49 : vector<1x256xf32>
    %52 = arith.mulf %51, %41 : vector<1x256xf32>
    %cst_10 = arith.constant dense<0.000000e+00> : vector<1xf32>
    %53 = vector.multi_reduction <add>, %52, %cst_10 [1] : vector<1x256xf32> to vector<1xf32>
    %54 = vector.shape_cast %53 : vector<1xf32> to vector<1x1xf32>
    %c0_11 = arith.constant 0 : index
    %c0_12 = arith.constant 0 : index
    %c0_13 = arith.constant 0 : index
    %c0_14 = arith.constant 0 : index
    %55 = vector.load %arg4[%c0_11, %c0_12, %c0_13, %c0_14] : memref<1x1x1x1xf32, #tpu.memory_space<vmem>>, vector<1x1x1x1xf32>
    %56 = vector.shape_cast %55 : vector<1x1x1x1xf32> to vector<1x1xf32>
    %57 = vector.shape_cast %54 : vector<1x1xf32> to vector<1x1x1x1xf32>
    tpu.vector_store %arg4[%c0_11, %c0_12, %c0_13, %c0_14], %57 {strides = array<i32>} : memref<1x1x1x1xf32, #tpu.memory_space<vmem>>, vector<1x1x1x1xf32>,
    return
  }
  func.func @transform_0(%arg0: i32, %arg1: i32) -> (i32, i32, i32) {
    %c0_i32 = arith.constant 0 : i32
    %c0_i32_0 = arith.constant 0 : i32
    return %arg0, %c0_i32, %arg1 : i32, i32, i32
  }
  func.func @transform_1(%arg0: i32, %arg1: i32) -> (i32, i32, i32) {
    %c0_i32 = arith.constant 0 : i32
    %c0_i32_0 = arith.constant 0 : i32
    return %arg0, %c0_i32, %arg1 : i32, i32, i32
  }
  func.func @transform_2(%arg0: i32, %arg1: i32) -> (i32, i32, i32, i32) {
    %c0_i32 = arith.constant 0 : i32
    %c0_i32_0 = arith.constant 0 : i32
    %c0_i32_1 = arith.constant 0 : i32
    return %arg0, %arg1, %c0_i32, %c0_i32_0 : i32, i32, i32, i32
  }
}

</mosaic_0001>

<llo_original>
// kernel: tpu_custom_call.1
$region0: #{tpu_custom_call.1}
  #allocation0 [shape = 'u32[]', space=smem, size = 0x4, offset = 0x4, fixed_abs, tag = 'smem constant byte address 0x4 - core index']
  #allocation1 [shape = 'u32[72,128]{1,0:T(1,128)}', space=vmem, size = 0x9000, scoped, tag = 'internal scratch']
  %s0 = inlined_call_operand.hbm [shape: f32[2,4,256], index: 0, kind: input, shape index: {}]
  %s1 = inlined_call_operand.hbm [shape: s32[2,1,256], index: 1, kind: input, shape index: {}]
  %s2 = inlined_call_operand.vmem [shape: f32[2,1,1,1], index: 2, kind: output, shape index: {}]
  %s3 = sld [smem:[#allocation0]]
  $region49: #{tpu_custom_call.1} parent=0
    _
  %s5 = ssub.s32 1, %s3
  %s6 = scalar_select 0, %s5, %s3
  $region1: #{tpu_custom_call.1} parent=0
    #allocation2 [shape = 'u8[8192]{0}', space=vmem, size = 0x2000, scoped, tag = 'input window, operand 0']
    #allocation3 [shape = 's32[2]{0}', space=sflag, size = 0x8, scoped, tag = 'scoped memory for tpu_custom_call.1']
    #allocation4 [shape = 'u8[2048]{0}', space=vmem, size = 0x800, scoped, tag = 'input window, operand 1']
    #allocation5 [shape = 's32[2]{0}', space=sflag, size = 0x8, scoped, tag = 'scoped memory for tpu_custom_call.1']
    %7 = vsyncpa [#allocation3], 0
    %s8 = scalar_lea.sflag [#allocation3], 1
    %9 = vsyncpa %s8, 0
    %10 = vsyncpa [#allocation5], 0
    %s11 = scalar_lea.sflag [#allocation5], 1
    %12 = vsyncpa %s11, 0
    loop: start=0, step=1, limit=4
    $region2: #{tpu_custom_call.1} parent=1 // loop_pre_header
      _
    $region3: #{tpu_custom_call.1} parent=1 // loop_header
      %s14 = sphi 0, %s18
      %p15 = scmp.ge.s32.totalorder %s14, 4
      %s21 = sphi 0, %s33
      %s22 = sphi 0, %s29
      %s23 = sphi 0, %s21
      %s24 = sphi 0, %s22
      %s25 = sphi 0, %s23
      %s26 = sphi 0, %s24
      %s38 = sphi 0, %s40
      %s41 = sphi 0, %s38
      %s42 = sphi 0, %s41
      %s58 = sphi 0, %s42
      %s66 = sphi 0, %s68
      %s69 = sphi 0, %s66
      %s70 = sphi 0, %s69
      %s86 = sphi 0, %s70
      %s94 = sphi 0, %s96
      %s97 = sphi 0, %s94
      %s98 = sphi 0, %s97
      %s114 = sphi 0, %s98
    $region4: #{tpu_custom_call.1} parent=1 // loop_header_branch
      %17 = sbr.rel (%p15) target = $region8
    $region5: #{tpu_custom_call.1} parent=1 // loop_body
      %s19 = ssub.s32 %s14, 1
      %s20 = ssub.s32 %s14, 2
      %s27 = sadd.s32 1, %s22
      %p28 = scmp.ge.s32.totalorder %s27, 1
      %s29 = scalar_select %p28, 0, %s27
      %s30 = sadd.s32 1, %s21
      %s31 = scalar_select %p28, %s30, %s21
      %p32 = scmp.ge.s32.totalorder %s31, 2
      %s33 = scalar_select %p32, 0, %s31
      %s34 = ssub.s32 %s21, %s33
      %s35 = ssub.s32 %s22, %s29
      %s36 = sor.u32 %s34, %s35
      %p37 = scmp.eq.s32.totalorder %s36, 0
      %s39 = sadd.s32 %s38, 1
      %s40 = scalar_select %p37, %s38, %s39
      %p43 = pneg %p37
      %p44 = scmp.eq.s32.totalorder %s14, 1
      %p45 = por %p43, %p44
      %p46 = scmp.ne.s32.totalorder %s38, %s41
      %p47 = scmp.eq.s32.totalorder %s14, 0
      %p48 = por %p46, %p47
      %p49 = scmp.ne.s32.totalorder %s38, %s41
      %p50 = scmp.eq.s32.totalorder %s19, 1
      %p51 = por %p49, %p50
      %p52 = scmp.ne.s32.totalorder %s41, %s42
      %p53 = scmp.eq.s32.totalorder %s19, 0
      %p54 = por %p52, %p53
      %p55 = scmp.ne.s32.totalorder %s41, %s42
      %p56 = scmp.eq.s32.totalorder %s20, 1
      %p57 = por %p55, %p56
      %p59 = scmp.ne.s32.totalorder %s42, %s58
      %p60 = scmp.eq.s32.totalorder %s20, 0
      %p61 = por %p59, %p60
      %s62 = ssub.s32 %s21, %s33
      %s63 = ssub.s32 %s22, %s29
      %s64 = sor.u32 %s62, %s63
      %p65 = scmp.eq.s32.totalorder %s64, 0
      %s67 = sadd.s32 %s66, 1
      %s68 = scalar_select %p65, %s66, %s67
      %p71 = pneg %p65
      %p72 = scmp.eq.s32.totalorder %s14, 1
      %p73 = por %p71, %p72
      %p74 = scmp.ne.s32.totalorder %s66, %s69
      %p75 = scmp.eq.s32.totalorder %s14, 0
      %p76 = por %p74, %p75
      %p77 = scmp.ne.s32.totalorder %s66, %s69
      %p78 = scmp.eq.s32.totalorder %s19, 1
      %p79 = por %p77, %p78
      %p80 = scmp.ne.s32.totalorder %s69, %s70
      %p81 = scmp.eq.s32.totalorder %s19, 0
      %p82 = por %p80, %p81
      %p83 = scmp.ne.s32.totalorder %s69, %s70
      %p84 = scmp.eq.s32.totalorder %s20, 1
      %p85 = por %p83, %p84
      %p87 = scmp.ne.s32.totalorder %s70, %s86
      %p88 = scmp.eq.s32.totalorder %s20, 0
      %p89 = por %p87, %p88
      %s90 = ssub.s32 %s21, %s33
      %s91 = ssub.s32 %s22, %s29
      %s92 = sor.u32 %s90, %s91
      %p93 = scmp.eq.s32.totalorder %s92, 0
      %s95 = sadd.s32 %s94, 1
      %s96 = scalar_select %p93, %s94, %s95
      %p99 = pneg %p93
      %p100 = scmp.eq.s32.totalorder %s14, 1
      %p101 = por %p99, %p100
      %p102 = scmp.ne.s32.totalorder %s94, %s97
      %p103 = scmp.eq.s32.totalorder %s14, 0
      %p104 = por %p102, %p103
      %p105 = scmp.ne.s32.totalorder %s94, %s97
      %p106 = scmp.eq.s32.totalorder %s19, 1
      %p107 = por %p105, %p106
      %p108 = scmp.ne.s32.totalorder %s97, %s98
      %p109 = scmp.eq.s32.totalorder %s19, 0
      %p110 = por %p108, %p109
      %p111 = scmp.ne.s32.totalorder %s97, %s98
      %p112 = scmp.eq.s32.totalorder %s20, 1
      %p113 = por %p111, %p112
      %p115 = scmp.ne.s32.totalorder %s98, %s114
      %p116 = scmp.eq.s32.totalorder %s20, 0
      %p117 = por %p115, %p116
      %p118 = scmp.le.s32.totalorder 1, %s14
      %p119 = scmp.lt.s32.totalorder %s14, 3
      %p120 = pnand %p118, %p119
      %p121 = pneg %p120
      // Predicated region
      $region9: #{tpu_custom_call.1} parent=5 // pred_check
        _
      $region10: #{tpu_custom_call.1} parent=5 // pred_check_branch
        %123 = sbr.rel (%p120) target = $region12
      $region11: #{tpu_custom_call.1} parent=5 // pred_region
        %s124 = ssub.s32 %s14, 1
      $region12: #{tpu_custom_call.1} parent=5 // pred_fallthru
        _
      %p125 = scmp.lt.s32.totalorder %s14, 2
      // Predicated region
      $region13: #{tpu_custom_call.1} parent=5 // pred_check
        %p126 = pneg %p125
      $region14: #{tpu_custom_call.1} parent=5 // pred_check_branch
        %128 = sbr.rel (%p126) target = $region16
      $region15: #{tpu_custom_call.1} parent=5 // pred_region
        // Predicated region
        $region17: #{tpu_custom_call.1} parent=15 // pred_check
          %p129 = pneg %p48
        $region18: #{tpu_custom_call.1} parent=15 // pred_check_branch
          %131 = sbr.rel (%p129) target = $region20
        $region19: #{tpu_custom_call.1} parent=15 // pred_region
          %s132 = sand.u32 %s38, 1
          %s133 = scalar_lea.sflag [#allocation3], %s132
          %s134 = sand.u32 %s38, 1
          %s135 = smul.addr %s134, 8
          %s136 = scalar_lea.vmem [#allocation2], %s135
          %s137 = smul.u32 2, %s22
          %139 = vsyncadd %s133, 0
          %s140 = smul.addr %s21, 2
          %s141 = sadd.s32 %s137, %s140
          %s142 = smul.addr %s141, 4
          %s143 = scalar_lea.hbm %s0, %s142
          %s145 = sshll.u32 %s143, 4
          %s146 = int_to_ptr.hbm [resolvable:$true] %s145
          %s147 = sshll.u32 %s136, 4
          %s148 = int_to_ptr.vmem [resolvable:$true] %s147
          %150 = dma.hbm_to_vmem [thread:$0]  %s146, 128, %s148, %s133
        $region20: #{tpu_custom_call.1} parent=15 // pred_fallthru
          _
        // Predicated region
        $region21: #{tpu_custom_call.1} parent=15 // pred_check
          %p151 = pneg %p76
        $region22: #{tpu_custom_call.1} parent=15 // pred_check_branch
          %153 = sbr.rel (%p151) target = $region24
        $region23: #{tpu_custom_call.1} parent=15 // pred_region
          %s154 = sand.u32 %s66, 1
          %s155 = scalar_lea.sflag [#allocation5], %s154
          %s156 = sand.u32 %s66, 1
          %s157 = smul.addr %s156, 2
          %s158 = scalar_lea.vmem [#allocation4], %s157
          %s159 = smul.u32 2, %s22
          %161 = vsyncadd %s155, 0
          %s162 = smul.addr %s21, 2
          %s163 = sadd.s32 %s159, %s162
          %s164 = scalar_lea.hbm %s1, %s163
          %s166 = sshll.u32 %s164, 4
          %s167 = int_to_ptr.hbm [resolvable:$true] %s166
          %s168 = sshll.u32 %s158, 4
          %s169 = int_to_ptr.vmem [resolvable:$true] %s168
          %171 = dma.hbm_to_vmem [thread:$0]  %s167, 32, %s169, %s155
        $region24: #{tpu_custom_call.1} parent=15 // pred_fallthru
          _
      $region16: #{tpu_custom_call.1} parent=5 // pred_fallthru
        _
      %p172 = scmp.le.s32.totalorder 1, %s14
      %p173 = scmp.lt.s32.totalorder %s14, 3
      %p174 = pnand %p172, %p173
      %p175 = pneg %p174
      // Predicated region
      $region25: #{tpu_custom_call.1} parent=5 // pred_check
        _
      $region26: #{tpu_custom_call.1} parent=5 // pred_check_branch
        %177 = sbr.rel (%p174) target = $region28
      $region27: #{tpu_custom_call.1} parent=5 // pred_region
        %s178 = ssub.s32 %s14, 1
        %s179 = sand.u32 %s41, 1
        %s180 = scalar_lea.sflag [#allocation3], %s179
        %s181 = sand.u32 %s41, 1
        %s182 = smul.addr %s181, 8
        %s183 = scalar_lea.vmem [#allocation2], %s182
        // Predicated region
        $region29: #{tpu_custom_call.1} parent=27 // pred_check
          %p184 = pneg %p54
        $region30: #{tpu_custom_call.1} parent=27 // pred_check_branch
          %186 = sbr.rel (%p184) target = $region32
        $region31: #{tpu_custom_call.1} parent=27 // pred_region
          %188 = dma.done %s180, 128
        $region32: #{tpu_custom_call.1} parent=27 // pred_fallthru
          _
        %s189 = sand.u32 %s69, 1
        %s190 = scalar_lea.sflag [#allocation5], %s189
        %s191 = sand.u32 %s69, 1
        %s192 = smul.addr %s191, 2
        %s193 = scalar_lea.vmem [#allocation4], %s192
        // Predicated region
        $region33: #{tpu_custom_call.1} parent=27 // pred_check
          %p194 = pneg %p82
        $region34: #{tpu_custom_call.1} parent=27 // pred_check_branch
          %196 = sbr.rel (%p194) target = $region36
        $region35: #{tpu_custom_call.1} parent=27 // pred_region
          %198 = dma.done %s190, 32
        $region36: #{tpu_custom_call.1} parent=27 // pred_fallthru
          _
        %s199 = sand.u32 %s41, 1
        %s200 = scalar_lea.sflag [#allocation3], %s199
        %s201 = sand.u32 %s41, 1
        %s202 = smul.addr %s201, 8
        %s203 = scalar_lea.vmem [#allocation2], %s202
        %p204 = pneg %p54
        %p205 = pneg %p51
        %s206 = sand.u32 %s69, 1
        %s207 = scalar_lea.sflag [#allocation5], %s206
        %s208 = sand.u32 %s69, 1
        %s209 = smul.addr %s208, 2
        %s210 = scalar_lea.vmem [#allocation4], %s209
        %p211 = pneg %p82
        %p212 = pneg %p79
        %p213 = pneg %p110
        %p214 = pneg %p107
        %p215 = scmp.lt.s32.totalorder %s23, 1
        %s216 = scalar_select %p215, %s23, 1
        %p217 = scmp.lt.s32.totalorder %s24, 0
        %s218 = scalar_select %p217, %s24, 0
        %s219 = sadd.s32 %s218, %s216
        %s220 = scalar_lea.vmem %s2, %s219
        %s221 = smul.u32 2, %s24
        %s222 = smul.u32 2, %s24
        %p223 = scmp.lt.s32.totalorder %s23, 1
        %s224 = scalar_select %p223, %s23, 1
        %p225 = scmp.lt.s32.totalorder %s24, 0
        %s226 = scalar_select %p225, %s24, 0
        %s227 = sadd.s32 %s226, %s224
        %s228 = scalar_lea.vmem %s2, %s227
        %v229 = vld [vmem:[%s183] sm:$0xff]
        %v230 = vld [vmem:[%s193] sm:$0x3]
        %v232 = vrot.slane %v229, 5
        %v233 = vrot.slane %v232, 4
        %v235 = vmax.f32 %v229, %v233
        %v236 = vrot.slane %v229, 6
        %v237 = vrot.slane %v236, 4
        %v239 = vmax.f32 %v235, %v237
        %v240 = vrot.slane %v229, 7
        %v241 = vrot.slane %v240, 4
        %v243 = vmax.f32 %v239, %v241
        %v245 = vperm.slane %v243, 0
        %v246 = vperm.slane %v243, 4
        %v249 = vperm.slane %v245, 0
        %v250 = vperm.slane %v246, 0
        %v253 = vrot.slane %v250, 4
        %vm254 = vcmask 1043456
        %v255 = vsel %vm254, %v249, %v253
        %v257 = vsub.f32 %v229, %v255
        %v258 = vmul.f32 %v257, 1.442695
        %v259 = vpow.pop %v258
        %v261 = vrot.slane %v259, 5
        %v262 = vrot.slane %v261, 4
        %v264 = vadd.f32 %v259, %v262
        %v265 = vrot.slane %v259, 6
        %v266 = vrot.slane %v265, 4
        %v268 = vadd.f32 %v264, %v266
        %v269 = vrot.slane %v259, 7
        %v270 = vrot.slane %v269, 4
        %v272 = vadd.f32 %v268, %v270
        %v273 = vlog2.pop %v272
        %v274 = vmul.f32 %v273, 0.6931472
        %vm275 = vcmp.eq.s32.totalorder %v230, 0
        %v277 = vrot.slane %v257, 3
        %vm278 = vcmask 1040384
        %v279 = vsel %vm278, %v257, %v277
        %v281 = vsel %vm275, %v279, 0.0
        %vm282 = vcmp.eq.s32.totalorder %v230, 1
        %283 = vst [vmem:[#allocation1] sm:$0xff] %v257
        %s284 = scalar_lea.vmem [#allocation1], 1
        %v285 = vld [vmem:[%s284] ss:$4 sm:$0xff]
        %v287 = vsel %vm282, %v285, %v281
        %vm288 = vcmp.eq.s32.totalorder %v230, 2
        %289 = vst [vmem:[#allocation1] sm:$0xff] %v257
        %s290 = scalar_lea.vmem [#allocation1], 2
        %v291 = vld [vmem:[%s290] ss:$4 sm:$0xff]
        %v293 = vsel %vm288, %v291, %v287
        %vm294 = vcmp.eq.s32.totalorder %v230, 3
        %295 = vst [vmem:[#allocation1] sm:$0xff] %v257
        %s296 = scalar_lea.vmem [#allocation1], 3
        %v297 = vld [vmem:[%s296] ss:$4 sm:$0xff]
        %v299 = vsel %vm294, %v297, %v293
        %v302 = vunpack.c.l.s4 286326784
        %v303 = vunpack.c.0.s8 %v302
        %v304 = vperm.slane %v299, %v303
        %v306 = vsub.f32 %v274, %v304
        %v307 = vmax.f32 %v306, 0.0
        %v308 = vsub.f32 0.0, %v307
        %v309 = vmul.f32 %v308, 1.442695
        %v310 = vpow.pop %v309
        %v311 = vsub.f32 1.0, %v310
        %v312 = vmul.f32 %v311, %v311
        %v313 = vmul.f32 %v312, %v307
        %v315 = vperm.slane %v313, 0
        %v316 = vperm.slane %v313, 4
        %v319 = vsel %vm278, %v315, 0.0
        %v320 = vsel %vm278, %v316, 0.0
        %v321 = vadd.f32 %v319, %v320
        %322 = vadd.xlane.f32.xlu0 %v321
        %v323 = vpop.xlane.xlu0 %322
        %vm324 = vcmask 0
        %325 = vst.msk [vmem:[%s228] sm:$0x1] %vm324, %v323
        %p326 = scmp.lt.s32.totalorder %s23, 1
        %s327 = scalar_select %p326, %s23, 1
        %p328 = scmp.lt.s32.totalorder %s24, 0
        %s329 = scalar_select %p328, %s24, 0
        %s330 = sadd.s32 %s329, %s327
        %s331 = scalar_lea.vmem %s2, %s330
        // Predicated region
        $region37: #{tpu_custom_call.1} parent=27 // pred_check
          %p332 = pneg %p107
        $region38: #{tpu_custom_call.1} parent=27 // pred_check_branch
          %334 = sbr.rel (%p332) target = $region40
        $region39: #{tpu_custom_call.1} parent=27 // pred_region
          _
        $region40: #{tpu_custom_call.1} parent=27 // pred_fallthru
          _
      $region28: #{tpu_custom_call.1} parent=5 // pred_fallthru
        _
      %p335 = scmp.le.s32.totalorder 2, %s14
      // Predicated region
      $region41: #{tpu_custom_call.1} parent=5 // pred_check
        %p336 = pneg %p335
      $region42: #{tpu_custom_call.1} parent=5 // pred_check_branch
        %338 = sbr.rel (%p336) target = $region44
      $region43: #{tpu_custom_call.1} parent=5 // pred_region
        %s339 = ssub.s32 %s14, 2
        // Predicated region
        $region45: #{tpu_custom_call.1} parent=43 // pred_check
          %p340 = pneg %p113
        $region46: #{tpu_custom_call.1} parent=43 // pred_check_branch
          %342 = sbr.rel (%p340) target = $region48
        $region47: #{tpu_custom_call.1} parent=43 // pred_region
          %p343 = scmp.lt.s32.totalorder %s25, 1
          %s344 = scalar_select %p343, %s25, 1
          %p345 = scmp.lt.s32.totalorder %s26, 0
          %s346 = scalar_select %p345, %s26, 0
          %s347 = sadd.s32 %s346, %s344
          %s348 = scalar_lea.vmem %s2, %s347
        $region48: #{tpu_custom_call.1} parent=43 // pred_fallthru
          _
      $region44: #{tpu_custom_call.1} parent=5 // pred_fallthru
        _
    $region6: #{tpu_custom_call.1} parent=1 // loop_footer
      %s18 = sadd.s32 1, %s14
    $region7: #{tpu_custom_call.1} parent=1 // loop_footer_branch
      %13 = sbr.rel target = $region3
    $region8: #{tpu_custom_call.1} parent=1 // loop_exit
      _
    %349 = vsyncpa [#allocation3], 1
    %s350 = scalar_lea.sflag [#allocation3], 1
    %351 = vsyncpa %s350, 1
    %352 = vsyncpa [#allocation5], 1
    %s353 = scalar_lea.sflag [#allocation5], 1
    %354 = vsyncpa %s353, 1

</llo_original>
